<compile_context>
chip_gen: v7x
topology: tpu7x:2x2x1
jax: 0.10.0
libtpu: 0.0.40
codegen_flags: <defaults>
</compile_context>

<pallas_src>
import functools

import jax
import jax.numpy as jnp
import numpy as np
from jax import lax
from jax.experimental import pallas as pl
from jax.experimental.pallas import tpu as pltpu


def _catmse_kernel(pred_ref, ref_ref, out_ref, acc_ref, *,
                   br, bw, m, w, n_row_blocks, n_col_blocks,
                   need_row_mask, need_col_mask):
    """Streaming sum((pred - ref)^2) over one chunk of (row, col) blocks."""
    c = pl.program_id(0)           # chunk (megacore-parallel axis)
    s = pl.program_id(1)           # step within chunk (reduction axis)
    steps = pl.num_programs(1)

    @pl.when(s == 0)
    def _():
        acc_ref[...] = jnp.zeros_like(acc_ref)

    d = pred_ref[...].astype(jnp.float32) - ref_ref[...].astype(jnp.float32)
    sq = d * d

    if need_row_mask or need_col_mask:
        # Logical block id (may overshoot the real block count by at most
        # nc - 1 when the chunk split does not divide evenly; the index_map
        # clamps the *read*, the mask below zeroes the *contribution*).
        blk = c * steps + s
        if n_col_blocks == 1:
            rb, cb = blk, 0
        else:
            rb = blk // n_col_blocks
            cb = blk % n_col_blocks
        row0 = rb * br
        col0 = cb * bw

        full = None
        if need_row_mask:
            full = row0 + br <= m
        if need_col_mask:
            cfull = col0 + bw <= w
            full = cfull if full is None else jnp.logical_and(full, cfull)

        @pl.when(full)                        # interior block: fast path
        def _():
            acc_ref[...] += sq

        @pl.when(jnp.logical_not(full))       # boundary / overshoot block
        def _():
            valid = None
            if need_row_mask:
                ri = lax.broadcasted_iota(jnp.int32, sq.shape, 0)
                valid = (row0 + ri) < m
            if need_col_mask:
                ci = lax.broadcasted_iota(jnp.int32, sq.shape, 1)
                cvalid = (col0 + ci) < w
                valid = cvalid if valid is None else jnp.logical_and(valid, cvalid)
            acc_ref[...] += jnp.where(valid, sq, jnp.float32(0.0))
    else:
        acc_ref[...] += sq

    @pl.when(s == steps - 1)
    def _():
        # Lane/sublane-dense (1, 8, 128) store; host reads element [0, 0].
        out_ref[...] = jnp.broadcast_to(jnp.sum(acc_ref[...]), (1, 8, 128))


def _sublane_quantum(dtype):
    """Native sublane tile height for a dtype (8 f32 / 16 bf16 / 32 int8)."""
    return max(8, 32 // np.dtype(dtype).itemsize)


def cat_mse_loss(pred, ref):
    """CatMSELoss.forward(pred, ref) with weighted=False, reduction='mean',
    no mask, no activation, floating-point (one-hot) reference."""
    nb_classes = pred.shape[1]
    if ref.shape[1] != nb_classes:
        raise ValueError(
            f"Number of classes not consistent. Expected {nb_classes} "
            f"but got {ref.shape[1]}.")
    if not jnp.issubdtype(ref.dtype, jnp.floating):
        # TODO(synk): integer label-map path (forward_labels) not implemented.
        raise NotImplementedError("Only floating-point (one-hot) refs supported.")
    if pred.shape != ref.shape:
        raise ValueError("pred and ref must have the same shape.")

    total = int(np.prod(pred.shape))               # B * C * n_spatial
    w = int(pred.shape[-1])
    m = total // w

    # Layout-free 2-D view (collapse leading dims, keep the last dim): no
    # host-side pad/copy; the kernel streams the tensors exactly once.
    p2 = pred.reshape(m, w)
    r2 = ref.reshape(m, w)

    p_isz = np.dtype(pred.dtype).itemsize
    r_isz = np.dtype(ref.dtype).itemsize
    bpe = max(p_isz, r_isz)
    sub = max(_sublane_quantum(pred.dtype), _sublane_quantum(ref.dtype))

    # ---- tile sizing: ~4 MiB per input block (v7x-sized; also fine on
    #      v6e/v5e with the scoped-VMEM limit raised), dtype-aware rows. ----
    target_block_bytes = 4 << 20
    if sub * w * bpe <= target_block_bytes:
        bw = w                                     # full width -> no col mask
        n_col_blocks = 1
        br_target = max(sub, (target_block_bytes // (w * bpe)) // sub * sub)
        br = m if m < sub else min(br_target, (m // sub) * sub)
    else:
        br = sub if m >= sub else m
        bw = (target_block_bytes // (br * bpe)) // 128 * 128
        bw = max(128, min(bw, (w // 128) * 128))
        n_col_blocks = -(-w // bw)
    n_row_blocks = -(-m // br)

    total_blocks = n_row_blocks * n_col_blocks
    nc = 2 if total_blocks >= 2 else 1             # chunks (megacore / dual-TC)
    steps = -(-total_blocks // nc)
    overshoot = nc * steps > total_blocks          # at most one duplicate block

    need_row_mask = (n_row_blocks * br > m) or overshoot
    need_col_mask = n_col_blocks * bw > w

    def in_index_map(c, s):
        blk = c * steps + s
        if n_col_blocks == 1:
            rb, cb = blk, 0
        else:
            rb = blk // n_col_blocks
            cb = blk % n_col_blocks
        if overshoot:
            rb = rb % n_row_blocks                 # duplicate read, masked in-kernel
        return (rb, cb)

    # VMEM budget: 2 double-buffered input blocks + f32 accumulator + output.
    blk_in_bytes = br * bw * (p_isz + r_isz)
    vmem_needed = 2 * blk_in_bytes + br * bw * 4 + nc * 8 * 128 * 4 + (1 << 16)
    vmem_limit = max(32 << 20, int(1.5 * vmem_needed))

    kernel = functools.partial(
        _catmse_kernel, br=br, bw=bw, m=m, w=w,
        n_row_blocks=n_row_blocks, n_col_blocks=n_col_blocks,
        need_row_mask=need_row_mask, need_col_mask=need_col_mask)

    partials = pl.pallas_call(
        kernel,
        out_shape=jax.ShapeDtypeStruct((nc, 8, 128), jnp.float32),
        grid_spec=pltpu.PrefetchScalarGridSpec(
            num_scalar_prefetch=0,
            grid=(nc, steps),
            in_specs=[pl.BlockSpec((br, bw), in_index_map),
                      pl.BlockSpec((br, bw), in_index_map)],
            out_specs=pl.BlockSpec((1, 8, 128), lambda c, s: (c, 0, 0)),
            scratch_shapes=[pltpu.VMEM((br, bw), jnp.float32)],
        ),
        compiler_params=pltpu.CompilerParams(
            # TODO(synk): on v7x, pltpu.CORE_PARALLEL on axis 0 (with nc set
            # to the core count) would guarantee dual-TensorCore sharding;
            # "parallel" is kept as the portable megacore hint so the kernel
            # compiles on single-core chips without core-count detection.
            dimension_semantics=("parallel", "arbitrary"),
            vmem_limit_bytes=vmem_limit,
        ),
        cost_estimate=pl.CostEstimate(
            flops=3 * nc * steps * br * bw,
            transcendentals=0,
            bytes_accessed=int(nc * steps * blk_in_bytes + nc * 8 * 128 * 4),
        ),
    )(p2, r2)

    # mean over classes, then batch == global sum / (B * C * n_spatial).
    # TODO(synk): for >~1e9-element tensors add a hierarchical final reduce.
    return jnp.sum(partials[:, 0, 0]) / jnp.float32(total)


def _ref_loss(pred, ref):
    """Plain-JAX reference with the same semantics (weighted=False, 'mean')."""
    B, C = pred.shape[0], pred.shape[1]
    d = (pred.astype(jnp.float32) - ref.astype(jnp.float32)).reshape(B, C, -1)
    per_bc = jnp.sum(d * d, axis=-1) / d.shape[-1]
    return jnp.mean(per_bc)


if __name__ == "__main__":
    # Case 1: small canonical shape (B=2, C=4, 16x16 spatial).
    k_pred, k_lab = jax.random.split(jax.random.PRNGKey(0))
    pred = jax.random.normal(k_pred, (2, 4, 16, 16), dtype=jnp.float32)
    labels = jax.random.randint(k_lab, (2, 16, 16), 0, 4)
    ref = jax.nn.one_hot(labels, 4, axis=1, dtype=jnp.float32)   # (B, C, H, W)
    loss = jax.block_until_ready(cat_mse_loss(pred, ref))
    np.testing.assert_allclose(np.asarray(loss), np.asarray(_ref_loss(pred, ref)),
                               rtol=1e-5, atol=1e-6)

    # Case 2: non-128-divisible 3-D spatial (exercises row-tail masking).
    k1, k2 = jax.random.split(jax.random.PRNGKey(1))
    pred2 = jax.random.normal(k1, (2, 3, 5, 7, 9), dtype=jnp.float32)
    lab2 = jax.random.randint(k2, (2, 5, 7, 9), 0, 3)
    ref2 = jax.nn.one_hot(lab2, 3, axis=1, dtype=jnp.float32)
    loss2 = jax.block_until_ready(cat_mse_loss(pred2, ref2))
    np.testing.assert_allclose(np.asarray(loss2), np.asarray(_ref_loss(pred2, ref2)),
                               rtol=1e-5, atol=1e-6)

    # Case 3: larger volume -> 3 row blocks, 2 chunks, odd block count
    # (exercises the duplicate-block clamp, full masking of the overshoot
    # step, and the accumulator reset between chunks).
    k3, k4 = jax.random.split(jax.random.PRNGKey(2))
    pred3 = jax.random.normal(k3, (2, 4, 520, 512), dtype=jnp.float32)
    lab3 = jax.random.randint(k4, (2, 520, 512), 0, 4)
    ref3 = jax.nn.one_hot(lab3, 4, axis=1, dtype=jnp.float32)
    loss3 = jax.block_until_ready(cat_mse_loss(pred3, ref3))
    np.testing.assert_allclose(np.asarray(loss3), np.asarray(_ref_loss(pred3, ref3)),
                               rtol=1e-4, atol=1e-6)

    # Case 4: bf16 inputs (exercises dtype-aware 16-row sublane tiling and
    # the in-kernel f32 cast path).
    k5, k6 = jax.random.split(jax.random.PRNGKey(3))
    pred4 = jax.random.normal(k5, (2, 3, 33, 128), dtype=jnp.bfloat16)
    lab4 = jax.random.randint(k6, (2, 33, 128), 0, 3)
    ref4 = jax.nn.one_hot(lab4, 3, axis=1, dtype=jnp.bfloat16)
    loss4 = jax.block_until_ready(cat_mse_loss(pred4, ref4))
    np.testing.assert_allclose(np.asarray(loss4), np.asarray(_ref_loss(pred4, ref4)),
                               rtol=1e-4, atol=1e-6)

    print("KERNEL_OK")
</pallas_src>

<mosaic_0001>
module attributes {stable_mosaic.version = 11 : i64} {
  func.func @_catmse_kernel(%arg0: i32, %arg1: i32, %arg2: memref<128x16xf32, #tpu.memory_space<vmem>>, %arg3: memref<128x16xf32, #tpu.memory_space<vmem>>, %arg4: memref<1x8x128xf32, #tpu.memory_space<vmem>>, %arg5: memref<128x16xf32, #tpu.memory_space<vmem>>) attributes {dimension_semantics = [#tpu.dimension_semantics<parallel>, #tpu.dimension_semantics<arbitrary>], iteration_bounds = array<i64: 1, 1>, scalar_prefetch = 0 : i64, scratch_operands = 1 : i64, tpu.core_type = #tpu.core_type<tc>, window_params = [{transform_indices = @transform_0, window_bounds = array<i64: 128, 16>}, {transform_indices = @transform_1, window_bounds = array<i64: 128, 16>}, {transform_indices = @transform_2, window_bounds = array<i64: 1, 8, 128>}]} {
    %c0_i32 = arith.constant 0 : i32
    %0 = arith.cmpi eq, %arg1, %c0_i32 : i32
    %1 = arith.extui %0 : i1 to i32
    %c0_i32_0 = arith.constant 0 : i32
    %2 = arith.cmpi ne, %1, %c0_i32_0 : i32
    scf.if %2 {
      %cst = arith.constant 0.000000e+00 : f32
      %13 = vector.broadcast %cst : f32 to vector<128x16xf32>
      %c0_10 = arith.constant 0 : index
      %c0_11 = arith.constant 0 : index
      %14 = vector.load %arg5[%c0_10, %c0_11] : memref<128x16xf32, #tpu.memory_space<vmem>>, vector<128x16xf32>
      tpu.vector_store %arg5[%c0_10, %c0_11], %13 {strides = array<i32>} : memref<128x16xf32, #tpu.memory_space<vmem>>, vector<128x16xf32>,
    } else {
    }
    %c0 = arith.constant 0 : index
    %c0_1 = arith.constant 0 : index
    %3 = vector.load %arg2[%c0, %c0_1] : memref<128x16xf32, #tpu.memory_space<vmem>>, vector<128x16xf32>
    %c0_2 = arith.constant 0 : index
    %c0_3 = arith.constant 0 : index
    %4 = vector.load %arg3[%c0_2, %c0_3] : memref<128x16xf32, #tpu.memory_space<vmem>>, vector<128x16xf32>
    %5 = arith.subf %3, %4 : vector<128x16xf32>
    %6 = arith.mulf %5, %5 : vector<128x16xf32>
    %c0_4 = arith.constant 0 : index
    %c0_5 = arith.constant 0 : index
    %7 = vector.load %arg5[%c0_4, %c0_5] : memref<128x16xf32, #tpu.memory_space<vmem>>, vector<128x16xf32>
    %8 = arith.addf %7, %6 : vector<128x16xf32>
    %c0_6 = arith.constant 0 : index
    %c0_7 = arith.constant 0 : index
    %9 = vector.load %arg5[%c0_6, %c0_7] : memref<128x16xf32, #tpu.memory_space<vmem>>, vector<128x16xf32>
    tpu.vector_store %arg5[%c0_6, %c0_7], %8 {strides = array<i32>} : memref<128x16xf32, #tpu.memory_space<vmem>>, vector<128x16xf32>,
    %c0_i32_8 = arith.constant 0 : i32
    %10 = arith.cmpi eq, %arg1, %c0_i32_8 : i32
    %11 = arith.extui %10 : i1 to i32
    %c0_i32_9 = arith.constant 0 : i32
    %12 = arith.cmpi ne, %11, %c0_i32_9 : i32
    scf.if %12 {
      %c0_10 = arith.constant 0 : index
      %c0_11 = arith.constant 0 : index
      %13 = vector.load %arg5[%c0_10, %c0_11] : memref<128x16xf32, #tpu.memory_space<vmem>>, vector<128x16xf32>
      %14 = vector.shape_cast %13 : vector<128x16xf32> to vector<1x128x16xf32>
      %cst = arith.constant dense<0.000000e+00> : vector<1xf32>
      %15 = vector.multi_reduction <add>, %14, %cst [1, 2] : vector<1x128x16xf32> to vector<1xf32>
      %16 = vector.shape_cast %15 : vector<1xf32> to vector<1x1x1xf32>
      %17 = vector.extract %16[0, 0, 0] : f32 from vector<1x1x1xf32>
      %18 = vector.broadcast %17 : f32 to vector<1x8x128xf32>
      %c0_12 = arith.constant 0 : index
      %c0_13 = arith.constant 0 : index
      %c0_14 = arith.constant 0 : index
      %19 = vector.load %arg4[%c0_12, %c0_13, %c0_14] : memref<1x8x128xf32, #tpu.memory_space<vmem>>, vector<1x8x128xf32>
      tpu.vector_store %arg4[%c0_12, %c0_13, %c0_14], %18 {strides = array<i32>} : memref<1x8x128xf32, #tpu.memory_space<vmem>>, vector<1x8x128xf32>,
    } else {
    }
    return
  }
  func.func @transform_0(%arg0: i32, %arg1: i32) -> (i32, i32) {
    %c1_i32 = arith.constant 1 : i32
    %0 = arith.muli %arg0, %c1_i32 : i32
    %1 = arith.addi %0, %arg1 : i32
    %c0_i32 = arith.constant 0 : i32
    %c0_i32_0 = arith.constant 0 : i32
    return %1, %c0_i32 : i32, i32
  }
  func.func @transform_1(%arg0: i32, %arg1: i32) -> (i32, i32) {
    %c1_i32 = arith.constant 1 : i32
    %0 = arith.muli %arg0, %c1_i32 : i32
    %1 = arith.addi %0, %arg1 : i32
    %c0_i32 = arith.constant 0 : i32
    %c0_i32_0 = arith.constant 0 : i32
    return %1, %c0_i32 : i32, i32
  }
  func.func @transform_2(%arg0: i32, %arg1: i32) -> (i32, i32, i32) {
    %c0_i32 = arith.constant 0 : i32
    %c0_i32_0 = arith.constant 0 : i32
    %c0_i32_1 = arith.constant 0 : i32
    return %arg0, %c0_i32, %c0_i32_0 : i32, i32, i32
  }
}

</mosaic_0001>

<llo_original>
// kernel: tpu_custom_call.1
$region0: #{tpu_custom_call.1}
  #allocation0 [shape = 'u32[]', space=smem, size = 0x4, offset = 0x4, fixed_abs, tag = 'smem constant byte address 0x4 - core index']
  #allocation1 [shape = 'u32[144,128]{1,0:T(1,128)}', space=vmem, size = 0x12000, scoped, tag = 'internal scratch']
  #allocation2 [shape = 'f32[128,16]{1,0:T(8,128)}', space=vmem, size = 0x10000, scoped, tag = 'scratch operand']
  %s0 = inlined_call_operand.vmem [shape: f32[128,16], index: 0, kind: input, shape index: {}]
  %s1 = inlined_call_operand.vmem [shape: f32[128,16], index: 1, kind: input, shape index: {}]
  %s2 = inlined_call_operand.hbm [shape: f32[1,8,128], index: 2, kind: output, shape index: {}]
  %s3 = sld [smem:[#allocation0]]
  $region26: #{tpu_custom_call.1} parent=0
    _
  %s5 = ssub.s32 1, %s3
  %s6 = scalar_select 0, %s5, %s3
  $region1: #{tpu_custom_call.1} parent=0
    #allocation3 [shape = 'u8[4096]{0}', space=vmem, size = 0x1000, scoped, tag = 'output window, operand 0, single buffered']
    #allocation4 [shape = 's32[1]{0}', space=sflag, size = 0x4, scoped, tag = 'scoped memory for tpu_custom_call.1']
    %7 = vsyncpa [#allocation4], 0
    // Predicated region
    $region2: #{tpu_custom_call.1} parent=1 // pred_check
      _
    $region3: #{tpu_custom_call.1} parent=1 // pred_check_branch
      %9 = sbr.rel (0) target = $region5
    $region4: #{tpu_custom_call.1} parent=1 // pred_region
      %s10 = sadd.s32 0, 0
      %s11 = smul.u32 16, %s10
      %p12 = scmp.lt.s32.totalorder %s11, 15
      %s13 = scalar_select %p12, %s11, 15
      %s14 = smul.addr %s13, 8
      %s15 = scalar_lea.vmem %s0, %s14
      %s16 = sadd.s32 0, 0
      %s17 = smul.u32 16, %s16
    $region5: #{tpu_custom_call.1} parent=1 // pred_fallthru
      _
    // Predicated region
    $region6: #{tpu_custom_call.1} parent=1 // pred_check
      _
    $region7: #{tpu_custom_call.1} parent=1 // pred_check_branch
      %19 = sbr.rel (0) target = $region9
    $region8: #{tpu_custom_call.1} parent=1 // pred_region
      %s20 = sadd.s32 0, 0
      %s21 = smul.u32 16, %s20
      %p22 = scmp.lt.s32.totalorder %s21, 15
      %s23 = scalar_select %p22, %s21, 15
      %s24 = smul.addr %s23, 8
      %s25 = scalar_lea.vmem %s1, %s24
      %s26 = sadd.s32 0, 0
      %s27 = smul.u32 16, %s26
    $region9: #{tpu_custom_call.1} parent=1 // pred_fallthru
      _
    %s28 = sadd.s32 0, 0
    %s29 = smul.u32 16, %s28
    %p30 = scmp.lt.s32.totalorder %s29, 15
    %s31 = scalar_select %p30, %s29, 15
    %s32 = smul.addr %s31, 8
    %s33 = scalar_lea.vmem %s0, %s32
    %s34 = sadd.s32 0, 0
    %s35 = smul.u32 16, %s34
    %p36 = scmp.lt.s32.totalorder %s35, 15
    %s37 = scalar_select %p36, %s35, 15
    %s38 = smul.addr %s37, 8
    %s39 = scalar_lea.vmem %s1, %s38
    %s40 = sadd.s32 0, 0
    %s41 = smul.u32 16, %s40
    %p42 = scmp.lt.s32.totalorder %s41, 15
    %s43 = scalar_select %p42, %s41, 15
    %s44 = smul.addr %s43, 8
    %s45 = scalar_lea.vmem %s0, %s44
    %s46 = sadd.s32 0, 0
    %s47 = smul.u32 16, %s46
    %s48 = sadd.s32 0, 0
    %s49 = smul.u32 16, %s48
    %p50 = scmp.lt.s32.totalorder %s49, 15
    %s51 = scalar_select %p50, %s49, 15
    %s52 = smul.addr %s51, 8
    %s53 = scalar_lea.vmem %s1, %s52
    %s54 = sadd.s32 0, 0
    %s55 = smul.u32 16, %s54
    %p56 = scmp.eq.s32.totalorder 0, 0
    // Predicated region
    $region10: #{tpu_custom_call.1} parent=1 // pred_check
      %p57 = pneg %p56
    $region11: #{tpu_custom_call.1} parent=1 // pred_check_branch
      %59 = sbr.rel (%p57) target = $region13
    $region12: #{tpu_custom_call.1} parent=1 // pred_region
      %vm60 = vcmask 130048
      %61 = vst.msk [vmem:[#allocation2] sm:$0xff] %vm60, 0.0
      %62 = vst.msk [vmem:[#allocation2 + $0x8] sm:$0xff] %vm60, 0.0
      %63 = vst.msk [vmem:[#allocation2 + $0x10] sm:$0xff] %vm60, 0.0
      %64 = vst.msk [vmem:[#allocation2 + $0x18] sm:$0xff] %vm60, 0.0
      %65 = vst.msk [vmem:[#allocation2 + $0x20] sm:$0xff] %vm60, 0.0
      %66 = vst.msk [vmem:[#allocation2 + $0x28] sm:$0xff] %vm60, 0.0
      %67 = vst.msk [vmem:[#allocation2 + $0x30] sm:$0xff] %vm60, 0.0
      %68 = vst.msk [vmem:[#allocation2 + $0x38] sm:$0xff] %vm60, 0.0
      %69 = vst.msk [vmem:[#allocation2 + $0x40] sm:$0xff] %vm60, 0.0
      %70 = vst.msk [vmem:[#allocation2 + $0x48] sm:$0xff] %vm60, 0.0
      %71 = vst.msk [vmem:[#allocation2 + $0x50] sm:$0xff] %vm60, 0.0
      %72 = vst.msk [vmem:[#allocation2 + $0x58] sm:$0xff] %vm60, 0.0
      %73 = vst.msk [vmem:[#allocation2 + $0x60] sm:$0xff] %vm60, 0.0
      %74 = vst.msk [vmem:[#allocation2 + $0x68] sm:$0xff] %vm60, 0.0
      %75 = vst.msk [vmem:[#allocation2 + $0x70] sm:$0xff] %vm60, 0.0
      %76 = vst.msk [vmem:[#allocation2 + $0x78] sm:$0xff] %vm60, 0.0
    $region13: #{tpu_custom_call.1} parent=1 // pred_fallthru
      _
    %v77 = vld [vmem:[%s45] sm:$0xff]
    %v78 = vld [vmem:[%s45 + $0x8] sm:$0xff]
    %v79 = vld [vmem:[%s45 + $0x10] sm:$0xff]
    %v80 = vld [vmem:[%s45 + $0x18] sm:$0xff]
    %v81 = vld [vmem:[%s45 + $0x20] sm:$0xff]
    %v82 = vld [vmem:[%s45 + $0x28] sm:$0xff]
    %v83 = vld [vmem:[%s45 + $0x30] sm:$0xff]
    %v84 = vld [vmem:[%s45 + $0x38] sm:$0xff]
    %v85 = vld [vmem:[%s45 + $0x40] sm:$0xff]
    %v86 = vld [vmem:[%s45 + $0x48] sm:$0xff]
    %v87 = vld [vmem:[%s45 + $0x50] sm:$0xff]
    %v88 = vld [vmem:[%s45 + $0x58] sm:$0xff]
    %v89 = vld [vmem:[%s45 + $0x60] sm:$0xff]
    %v90 = vld [vmem:[%s45 + $0x68] sm:$0xff]
    %v91 = vld [vmem:[%s45 + $0x70] sm:$0xff]
    %v92 = vld [vmem:[%s45 + $0x78] sm:$0xff]
    %v93 = vld [vmem:[%s53] sm:$0xff]
    %v94 = vld [vmem:[%s53 + $0x8] sm:$0xff]
    %v95 = vld [vmem:[%s53 + $0x10] sm:$0xff]
    %v96 = vld [vmem:[%s53 + $0x18] sm:$0xff]
    %v97 = vld [vmem:[%s53 + $0x20] sm:$0xff]
    %v98 = vld [vmem:[%s53 + $0x28] sm:$0xff]
    %v99 = vld [vmem:[%s53 + $0x30] sm:$0xff]
    %v100 = vld [vmem:[%s53 + $0x38] sm:$0xff]
    %v101 = vld [vmem:[%s53 + $0x40] sm:$0xff]
    %v102 = vld [vmem:[%s53 + $0x48] sm:$0xff]
    %v103 = vld [vmem:[%s53 + $0x50] sm:$0xff]
    %v104 = vld [vmem:[%s53 + $0x58] sm:$0xff]
    %v105 = vld [vmem:[%s53 + $0x60] sm:$0xff]
    %v106 = vld [vmem:[%s53 + $0x68] sm:$0xff]
    %v107 = vld [vmem:[%s53 + $0x70] sm:$0xff]
    %v108 = vld [vmem:[%s53 + $0x78] sm:$0xff]
    %v109 = vsub.f32 %v77, %v93
    %v110 = vsub.f32 %v78, %v94
    %v111 = vsub.f32 %v79, %v95
    %v112 = vsub.f32 %v80, %v96
    %v113 = vsub.f32 %v81, %v97
    %v114 = vsub.f32 %v82, %v98
    %v115 = vsub.f32 %v83, %v99
    %v116 = vsub.f32 %v84, %v100
    %v117 = vsub.f32 %v85, %v101
    %v118 = vsub.f32 %v86, %v102
    %v119 = vsub.f32 %v87, %v103
    %v120 = vsub.f32 %v88, %v104
    %v121 = vsub.f32 %v89, %v105
    %v122 = vsub.f32 %v90, %v106
    %v123 = vsub.f32 %v91, %v107
    %v124 = vsub.f32 %v92, %v108
    %v125 = vmul.f32 %v109, %v109
    %v126 = vmul.f32 %v110, %v110
    %v127 = vmul.f32 %v111, %v111
    %v128 = vmul.f32 %v112, %v112
    %v129 = vmul.f32 %v113, %v113
    %v130 = vmul.f32 %v114, %v114
    %v131 = vmul.f32 %v115, %v115
    %v132 = vmul.f32 %v116, %v116
    %v133 = vmul.f32 %v117, %v117
    %v134 = vmul.f32 %v118, %v118
    %v135 = vmul.f32 %v119, %v119
    %v136 = vmul.f32 %v120, %v120
    %v137 = vmul.f32 %v121, %v121
    %v138 = vmul.f32 %v122, %v122
    %v139 = vmul.f32 %v123, %v123
    %v140 = vmul.f32 %v124, %v124
    %v141 = vld [vmem:[#allocation2] sm:$0xff]
    %v142 = vld [vmem:[#allocation2 + $0x8] sm:$0xff]
    %v143 = vld [vmem:[#allocation2 + $0x10] sm:$0xff]
    %v144 = vld [vmem:[#allocation2 + $0x18] sm:$0xff]
    %v145 = vld [vmem:[#allocation2 + $0x20] sm:$0xff]
    %v146 = vld [vmem:[#allocation2 + $0x28] sm:$0xff]
    %v147 = vld [vmem:[#allocation2 + $0x30] sm:$0xff]
    %v148 = vld [vmem:[#allocation2 + $0x38] sm:$0xff]
    %v149 = vld [vmem:[#allocation2 + $0x40] sm:$0xff]
    %v150 = vld [vmem:[#allocation2 + $0x48] sm:$0xff]
    %v151 = vld [vmem:[#allocation2 + $0x50] sm:$0xff]
    %v152 = vld [vmem:[#allocation2 + $0x58] sm:$0xff]
    %v153 = vld [vmem:[#allocation2 + $0x60] sm:$0xff]
    %v154 = vld [vmem:[#allocation2 + $0x68] sm:$0xff]
    %v155 = vld [vmem:[#allocation2 + $0x70] sm:$0xff]
    %v156 = vld [vmem:[#allocation2 + $0x78] sm:$0xff]
    %v157 = vadd.f32 %v141, %v125
    %v158 = vadd.f32 %v142, %v126
    %v159 = vadd.f32 %v143, %v127
    %v160 = vadd.f32 %v144, %v128
    %v161 = vadd.f32 %v145, %v129
    %v162 = vadd.f32 %v146, %v130
    %v163 = vadd.f32 %v147, %v131
    %v164 = vadd.f32 %v148, %v132
    %v165 = vadd.f32 %v149, %v133
    %v166 = vadd.f32 %v150, %v134
    %v167 = vadd.f32 %v151, %v135
    %v168 = vadd.f32 %v152, %v136
    %v169 = vadd.f32 %v153, %v137
    %v170 = vadd.f32 %v154, %v138
    %v171 = vadd.f32 %v155, %v139
    %v172 = vadd.f32 %v156, %v140
    %vm173 = vcmask 130048
    %174 = vst.msk [vmem:[#allocation2] sm:$0xff] %vm173, %v157
    %175 = vst.msk [vmem:[#allocation2 + $0x8] sm:$0xff] %vm173, %v158
    %176 = vst.msk [vmem:[#allocation2 + $0x10] sm:$0xff] %vm173, %v159
    %177 = vst.msk [vmem:[#allocation2 + $0x18] sm:$0xff] %vm173, %v160
    %178 = vst.msk [vmem:[#allocation2 + $0x20] sm:$0xff] %vm173, %v161
    %179 = vst.msk [vmem:[#allocation2 + $0x28] sm:$0xff] %vm173, %v162
    %180 = vst.msk [vmem:[#allocation2 + $0x30] sm:$0xff] %vm173, %v163
    %181 = vst.msk [vmem:[#allocation2 + $0x38] sm:$0xff] %vm173, %v164
    %182 = vst.msk [vmem:[#allocation2 + $0x40] sm:$0xff] %vm173, %v165
    %183 = vst.msk [vmem:[#allocation2 + $0x48] sm:$0xff] %vm173, %v166
    %184 = vst.msk [vmem:[#allocation2 + $0x50] sm:$0xff] %vm173, %v167
    %185 = vst.msk [vmem:[#allocation2 + $0x58] sm:$0xff] %vm173, %v168
    %186 = vst.msk [vmem:[#allocation2 + $0x60] sm:$0xff] %vm173, %v169
    %187 = vst.msk [vmem:[#allocation2 + $0x68] sm:$0xff] %vm173, %v170
    %188 = vst.msk [vmem:[#allocation2 + $0x70] sm:$0xff] %vm173, %v171
    %189 = vst.msk [vmem:[#allocation2 + $0x78] sm:$0xff] %vm173, %v172
    // Predicated region
    $region14: #{tpu_custom_call.1} parent=1 // pred_check
      %p190 = pneg %p56
    $region15: #{tpu_custom_call.1} parent=1 // pred_check_branch
      %192 = sbr.rel (%p190) target = $region17
    $region16: #{tpu_custom_call.1} parent=1 // pred_region
      %v193 = vld [vmem:[#allocation2] sm:$0xff]
      %v194 = vld [vmem:[#allocation2 + $0x8] sm:$0xff]
      %v195 = vld [vmem:[#allocation2 + $0x10] sm:$0xff]
      %v196 = vld [vmem:[#allocation2 + $0x18] sm:$0xff]
      %v197 = vld [vmem:[#allocation2 + $0x20] sm:$0xff]
      %v198 = vld [vmem:[#allocation2 + $0x28] sm:$0xff]
      %v199 = vld [vmem:[#allocation2 + $0x30] sm:$0xff]
      %v200 = vld [vmem:[#allocation2 + $0x38] sm:$0xff]
      %v201 = vld [vmem:[#allocation2 + $0x40] sm:$0xff]
      %v202 = vld [vmem:[#allocation2 + $0x48] sm:$0xff]
      %v203 = vld [vmem:[#allocation2 + $0x50] sm:$0xff]
      %v204 = vld [vmem:[#allocation2 + $0x58] sm:$0xff]
      %v205 = vld [vmem:[#allocation2 + $0x60] sm:$0xff]
      %v206 = vld [vmem:[#allocation2 + $0x68] sm:$0xff]
      %v207 = vld [vmem:[#allocation2 + $0x70] sm:$0xff]
      %v208 = vld [vmem:[#allocation2 + $0x78] sm:$0xff]
      %v209 = vsel %vm173, %v193, 0.0
      %v210 = vsel %vm173, %v194, 0.0
      %v211 = vadd.f32 %v209, %v210
      %v212 = vsel %vm173, %v195, 0.0
      %v213 = vadd.f32 %v211, %v212
      %v214 = vsel %vm173, %v196, 0.0
      %v215 = vadd.f32 %v213, %v214
      %v216 = vsel %vm173, %v197, 0.0
      %v217 = vadd.f32 %v215, %v216
      %v218 = vsel %vm173, %v198, 0.0
      %v219 = vadd.f32 %v217, %v218
      %v220 = vsel %vm173, %v199, 0.0
      %v221 = vadd.f32 %v219, %v220
      %v222 = vsel %vm173, %v200, 0.0
      %v223 = vadd.f32 %v221, %v222
      %v224 = vsel %vm173, %v201, 0.0
      %v225 = vadd.f32 %v223, %v224
      %v226 = vsel %vm173, %v202, 0.0
      %v227 = vadd.f32 %v225, %v226
      %v228 = vsel %vm173, %v203, 0.0
      %v229 = vadd.f32 %v227, %v228
      %v230 = vsel %vm173, %v204, 0.0
      %v231 = vadd.f32 %v229, %v230
      %v232 = vsel %vm173, %v205, 0.0
      %v233 = vadd.f32 %v231, %v232
      %v234 = vsel %vm173, %v206, 0.0
      %v235 = vadd.f32 %v233, %v234
      %v236 = vsel %vm173, %v207, 0.0
      %v237 = vadd.f32 %v235, %v236
      %v238 = vsel %vm173, %v208, 0.0
      %v239 = vadd.f32 %v237, %v238
      %240 = vadd.xlane.f32.xlu0 %v239
      %v241 = vpop.xlane.xlu0 %240
      %v242 = vrot.slane %v241, 4
      %v243 = vadd.f32 %v241, %v242
      %v244 = vrot.slane %v243, 2
      %v245 = vadd.f32 %v243, %v244
      %v246 = vrot.slane %v245, 1
      %v247 = vadd.f32 %v245, %v246
      %s248 = vtos %v247
      %v249 = vstv %s248
      %250 = vst [vmem:[#allocation3] sm:$0xff] %v249
    $region17: #{tpu_custom_call.1} parent=1 // pred_fallthru
      _
    // Predicated region
    $region18: #{tpu_custom_call.1} parent=1 // pred_check
      _
    $region19: #{tpu_custom_call.1} parent=1 // pred_check_branch
      %252 = sbr.rel (0) target = $region21
    $region20: #{tpu_custom_call.1} parent=1 // pred_region
      %s254 = ssub.s32 128, 128
      %255 = vsyncadd [#allocation4], %s254
      %s257 = sshll.u32 [#allocation3], 4
      %s258 = int_to_ptr.vmem [resolvable:$true] %s257
      %260 = dma.vmem_to_hbm [thread:$0]  %s258, 128, %s2, [#allocation4]
    $region21: #{tpu_custom_call.1} parent=1 // pred_fallthru
      _
    // Predicated region
    $region22: #{tpu_custom_call.1} parent=1 // pred_check
      _
    $region23: #{tpu_custom_call.1} parent=1 // pred_check_branch
      %262 = sbr.rel (0) target = $region25
    $region24: #{tpu_custom_call.1} parent=1 // pred_region
      %263 = dma.done [#allocation4], 128
    $region25: #{tpu_custom_call.1} parent=1 // pred_fallthru
      _
    %264 = vsyncpa [#allocation4], 1

</llo_original>
